<compile_context>
chip_gen: v7x
topology: tpu7x:2x2x1
jax: 0.10.0
libtpu: 0.0.40
codegen_flags: <defaults>
</compile_context>

<pallas_src>
import functools
import math

import jax
import jax.numpy as jnp
from jax.experimental import pallas as pl
from jax.experimental.pallas import tpu as pltpu


def _round_up(x, m):
    return ((x + m - 1) // m) * m


def _gelu(h, approximate):
    if approximate:
        # tanh GELU -> EUP (separate VLIW slot), cheap when MXU-bound.
        return jax.nn.gelu(h, approximate=True)
    # exact erf-GELU == torch.nn.GELU() default semantics.
    return 0.5 * h * (1.0 + jax.lax.erf(h * (1.0 / math.sqrt(2.0))))


def _mlp_kernel_fused(x_ref, w1_ref, b1_ref, w2_ref, b2_ref, o_ref, *,
                      approximate_gelu):
    """Fast path: the whole hidden dim fits in one block (no accumulator)."""
    x = x_ref[...].astype(w1_ref.dtype)
    h = jnp.dot(x, w1_ref[...], preferred_element_type=jnp.float32)
    h = h + b1_ref[...]                              # f32 bias on f32 accum
    h = _gelu(h, approximate_gelu)
    out = jnp.dot(h.astype(w2_ref.dtype), w2_ref[...],
                  preferred_element_type=jnp.float32)
    o_ref[...] = (out + b2_ref[...]).astype(o_ref.dtype)


def _mlp_kernel_chunked(x_ref, w1_ref, b1_ref, w2_ref, b2_ref, o_ref, acc_ref,
                        *, approximate_gelu):
    """H chunked on grid axis 1; fc2 partials accumulated in f32 scratch."""
    h_idx = pl.program_id(1)

    @pl.when(h_idx == 0)
    def _():
        acc_ref[...] = jnp.zeros_like(acc_ref)

    x = x_ref[...].astype(w1_ref.dtype)
    h = jnp.dot(x, w1_ref[...], preferred_element_type=jnp.float32)
    h = h + b1_ref[...]
    h = _gelu(h, approximate_gelu)

    acc_ref[...] += jnp.dot(h.astype(w2_ref.dtype), w2_ref[...],
                            preferred_element_type=jnp.float32)

    @pl.when(h_idx == pl.num_programs(1) - 1)
    def _():
        o_ref[...] = (acc_ref[...] + b2_ref[...]).astype(o_ref.dtype)


def _pick_th(H):
    """Largest lane-aligned chunk of H; keep H whole when it is modest."""
    if H <= 2048:
        return H
    for c in (2048, 1024, 512, 256, 128):
        if H % c == 0:
            return c
    return H


def mlp_pallas(x, w1, b1, w2, b2, *, tm=512, th=None, approximate_gelu=False):
    """x: [..., C_in]; w1: [C_in, H]; b1: [H]; w2: [H, C_out]; b2: [C_out]."""
    *lead, C_in = x.shape
    H = w1.shape[1]
    C_out = w2.shape[1]
    M = math.prod(lead) if lead else 1

    if th is None:
        th = _pick_th(H)
    assert H % th == 0, "hidden chunk must divide hidden dim"
    num_h = H // th

    # Token tile: multiple of 8 (sublane); never exceed the padded token count.
    tm = min(tm, _round_up(M, 8))
    tm = max(8, (tm // 8) * 8)

    wsize = jnp.dtype(w1.dtype).itemsize
    xsize = jnp.dtype(x.dtype).itemsize

    def _vmem_bytes(tm_):
        return (2 * tm_ * C_in * xsize            # x tile (double-buffered)
                + 2 * tm_ * C_out * xsize         # out tile (double-buffered)
                + 2 * (C_in * th + th * C_out) * wsize   # weight chunks
                + 2 * (th + C_out) * 4            # f32 biases
                + tm_ * C_out * 4                 # f32 accumulator scratch
                + tm_ * th * 4)                   # live fc1 intermediate

    # Keep the footprint comfortably inside scoped VMEM on v5e/v6e/v7x.
    budget = 28 << 20
    while tm > 8 and _vmem_bytes(tm) > budget:
        tm = max(8, (tm // 2) // 8 * 8)

    M_pad = _round_up(M, tm)
    x2d = x.reshape(M, C_in)
    if M_pad != M:
        x2d = jnp.pad(x2d, ((0, M_pad - M), (0, 0)))

    b1_2d = b1.reshape(1, H).astype(jnp.float32)
    b2_2d = b2.reshape(1, C_out).astype(jnp.float32)

    grid = (M_pad // tm, num_h)

    cost = pl.CostEstimate(
        flops=2 * M_pad * (C_in * H + H * C_out),
        transcendentals=M_pad * H,
        bytes_accessed=(M_pad * (C_in + C_out) * xsize
                        + (C_in * H + H * C_out) * wsize
                        + (H + C_out) * 4),
    )

    if num_h == 1:
        kernel = functools.partial(_mlp_kernel_fused,
                                   approximate_gelu=approximate_gelu)
        scratch_shapes = []
    else:
        kernel = functools.partial(_mlp_kernel_chunked,
                                   approximate_gelu=approximate_gelu)
        scratch_shapes = [pltpu.VMEM((tm, C_out), jnp.float32)]

    out2d = pl.pallas_call(
        kernel,
        out_shape=jax.ShapeDtypeStruct((M_pad, C_out), x.dtype),
        grid_spec=pltpu.PrefetchScalarGridSpec(
            num_scalar_prefetch=0,
            grid=grid,
            in_specs=[
                pl.BlockSpec((tm, C_in), lambda i, h: (i, 0)),
                pl.BlockSpec((C_in, th), lambda i, h: (0, h)),
                pl.BlockSpec((1, th), lambda i, h: (0, h)),
                pl.BlockSpec((th, C_out), lambda i, h: (h, 0)),
                pl.BlockSpec((1, C_out), lambda i, h: (0, 0)),
            ],
            out_specs=pl.BlockSpec((tm, C_out), lambda i, h: (i, 0)),
            scratch_shapes=scratch_shapes,
        ),
        compiler_params=pltpu.CompilerParams(
            dimension_semantics=("parallel", "arbitrary"),
            vmem_limit_bytes=48 << 20),
        cost_estimate=cost,
    )(x2d, w1, b1_2d, w2, b2_2d)

    if M_pad != M:
        out2d = out2d[:M]
    return out2d.reshape(*lead, C_out)


def init_mlp_params(key, in_features, hidden_features, out_features,
                    dtype=jnp.float32):
    """Deterministic init mimicking nn.Linear defaults (kaiming-uniform-ish).
    Weights stored as (in, out) so the kernel does x @ W (== PyTorch x @ W.T)."""
    k1, k2, k3, k4 = jax.random.split(key, 4)
    bound1 = 1.0 / math.sqrt(in_features)
    bound2 = 1.0 / math.sqrt(hidden_features)
    w1 = jax.random.uniform(k1, (in_features, hidden_features),
                            minval=-bound1, maxval=bound1, dtype=dtype)
    b1 = jax.random.uniform(k2, (hidden_features,), minval=-bound1,
                            maxval=bound1, dtype=dtype)
    w2 = jax.random.uniform(k3, (hidden_features, out_features),
                            minval=-bound2, maxval=bound2, dtype=dtype)
    b2 = jax.random.uniform(k4, (out_features,), minval=-bound2,
                            maxval=bound2, dtype=dtype)
    return w1, b1, w2, b2


def mlp_reference(x, w1, b1, w2, b2):
    h = x @ w1 + b1
    h = 0.5 * h * (1.0 + jax.lax.erf(h / math.sqrt(2.0)))
    return h @ w2 + b2


if __name__ == "__main__":
    key = jax.random.PRNGKey(0)
    kx, kp = jax.random.split(key)

    B, N = 2, 197            # DINO-like token count (not a multiple of the tile)
    in_features = 32
    hidden_features = 128
    out_features = 32

    x = jax.random.normal(kx, (B, N, in_features), dtype=jnp.float32)
    w1, b1, w2, b2 = init_mlp_params(kp, in_features, hidden_features,
                                     out_features)

    y = mlp_pallas(x, w1, b1, w2, b2)
    y = jax.block_until_ready(y)

    y_ref = mlp_reference(x, w1, b1, w2, b2)
    assert y.shape == (B, N, out_features)
    assert jnp.allclose(y, y_ref, atol=1e-4, rtol=1e-4), "mismatch vs reference"

    print("KERNEL_OK")
</pallas_src>

<mosaic_0001>
module attributes {stable_mosaic.version = 11 : i64} {
  func.func @_mlp_kernel_fused(%arg0: i32, %arg1: i32, %arg2: memref<400x32xf32, #tpu.memory_space<vmem>>, %arg3: memref<32x128xf32, #tpu.memory_space<vmem>>, %arg4: memref<1x128xf32, #tpu.memory_space<vmem>>, %arg5: memref<128x32xf32, #tpu.memory_space<vmem>>, %arg6: memref<1x32xf32, #tpu.memory_space<vmem>>, %arg7: memref<400x32xf32, #tpu.memory_space<vmem>>) attributes {dimension_semantics = [#tpu.dimension_semantics<parallel>, #tpu.dimension_semantics<arbitrary>], iteration_bounds = array<i64: 1, 1>, scalar_prefetch = 0 : i64, scratch_operands = 0 : i64, tpu.core_type = #tpu.core_type<tc>, window_params = [{transform_indices = @transform_0, window_bounds = array<i64: 400, 32>}, {transform_indices = @transform_1, window_bounds = array<i64: 32, 128>}, {transform_indices = @transform_2, window_bounds = array<i64: 1, 128>}, {transform_indices = @transform_3, window_bounds = array<i64: 128, 32>}, {pipeline_mode = #tpu.pipeline_mode<synchronous>, transform_indices = @transform_4, window_bounds = array<i64: 1, 32>}, {transform_indices = @transform_5, window_bounds = array<i64: 400, 32>}]} {
    %c0 = arith.constant 0 : index
    %c0_0 = arith.constant 0 : index
    %0 = vector.load %arg2[%c0, %c0_0] : memref<400x32xf32, #tpu.memory_space<vmem>>, vector<400x32xf32>
    %c0_1 = arith.constant 0 : index
    %c0_2 = arith.constant 0 : index
    %1 = vector.load %arg3[%c0_1, %c0_2] : memref<32x128xf32, #tpu.memory_space<vmem>>, vector<32x128xf32>
    %cst = arith.constant dense<0.000000e+00> : vector<400x128xf32>
    %2 = tpu.matmul %0, %1, %cst {dimension_numbers = #tpu.dot_dimension_numbers<[1], [0], [0], [1], [0, 0, 1, 1], [], []>} : vector<400x32xf32>, vector<32x128xf32>, vector<400x128xf32> -> vector<400x128xf32>
    %c0_3 = arith.constant 0 : index
    %c0_4 = arith.constant 0 : index
    %3 = vector.load %arg4[%c0_3, %c0_4] : memref<1x128xf32, #tpu.memory_space<vmem>>, vector<1x128xf32>
    %4 = vector.broadcast %3 : vector<1x128xf32> to vector<400x128xf32>
    %5 = arith.addf %2, %4 : vector<400x128xf32>
    %cst_5 = arith.constant 5.000000e-01 : f32
    %6 = vector.broadcast %cst_5 : f32 to vector<400x128xf32>
    %7 = arith.mulf %6, %5 : vector<400x128xf32>
    %cst_6 = arith.constant 0.707106769 : f32
    %8 = vector.broadcast %cst_6 : f32 to vector<400x128xf32>
    %9 = arith.mulf %5, %8 : vector<400x128xf32>
    %10 = math.erf %9 : vector<400x128xf32>
    %cst_7 = arith.constant 1.000000e+00 : f32
    %11 = vector.broadcast %cst_7 : f32 to vector<400x128xf32>
    %12 = arith.addf %11, %10 : vector<400x128xf32>
    %13 = arith.mulf %7, %12 : vector<400x128xf32>
    %c0_8 = arith.constant 0 : index
    %c0_9 = arith.constant 0 : index
    %14 = vector.load %arg5[%c0_8, %c0_9] : memref<128x32xf32, #tpu.memory_space<vmem>>, vector<128x32xf32>
    %cst_10 = arith.constant dense<0.000000e+00> : vector<400x32xf32>
    %15 = tpu.matmul %13, %14, %cst_10 {dimension_numbers = #tpu.dot_dimension_numbers<[1], [0], [0], [1], [0, 0, 1, 1], [], []>} : vector<400x128xf32>, vector<128x32xf32>, vector<400x32xf32> -> vector<400x32xf32>
    %c0_11 = arith.constant 0 : index
    %c0_12 = arith.constant 0 : index
    %16 = vector.load %arg6[%c0_11, %c0_12] : memref<1x32xf32, #tpu.memory_space<vmem>>, vector<1x32xf32>
    %17 = vector.broadcast %16 : vector<1x32xf32> to vector<400x32xf32>
    %18 = arith.addf %15, %17 : vector<400x32xf32>
    %c0_13 = arith.constant 0 : index
    %c0_14 = arith.constant 0 : index
    %19 = vector.load %arg7[%c0_13, %c0_14] : memref<400x32xf32, #tpu.memory_space<vmem>>, vector<400x32xf32>
    tpu.vector_store %arg7[%c0_13, %c0_14], %18 {strides = array<i32>} : memref<400x32xf32, #tpu.memory_space<vmem>>, vector<400x32xf32>,
    return
  }
  func.func @transform_0(%arg0: i32, %arg1: i32) -> (i32, i32) {
    %c0_i32 = arith.constant 0 : i32
    %c0_i32_0 = arith.constant 0 : i32
    return %arg0, %c0_i32 : i32, i32
  }
  func.func @transform_1(%arg0: i32, %arg1: i32) -> (i32, i32) {
    %c0_i32 = arith.constant 0 : i32
    %c0_i32_0 = arith.constant 0 : i32
    return %c0_i32, %arg1 : i32, i32
  }
  func.func @transform_2(%arg0: i32, %arg1: i32) -> (i32, i32) {
    %c0_i32 = arith.constant 0 : i32
    %c0_i32_0 = arith.constant 0 : i32
    return %c0_i32, %arg1 : i32, i32
  }
  func.func @transform_3(%arg0: i32, %arg1: i32) -> (i32, i32) {
    %c0_i32 = arith.constant 0 : i32
    %c0_i32_0 = arith.constant 0 : i32
    return %arg1, %c0_i32 : i32, i32
  }
  func.func @transform_4(%arg0: i32, %arg1: i32) -> (i32, i32) {
    %c0_i32 = arith.constant 0 : i32
    %c0_i32_0 = arith.constant 0 : i32
    %c0_i32_1 = arith.constant 0 : i32
    return %c0_i32, %c0_i32_0 : i32, i32
  }
  func.func @transform_5(%arg0: i32, %arg1: i32) -> (i32, i32) {
    %c0_i32 = arith.constant 0 : i32
    %c0_i32_0 = arith.constant 0 : i32
    return %arg0, %c0_i32 : i32, i32
  }
}

</mosaic_0001>

<llo_original>
// kernel: tpu_custom_call.1
$region0: #{tpu_custom_call.1}
  #allocation0 [shape = 'u32[]', space=smem, size = 0x4, offset = 0x4, fixed_abs, tag = 'smem constant byte address 0x4 - core index']
  #allocation1 [shape = 'u32[144,128]{1,0:T(1,128)}', space=vmem, size = 0x12000, scoped, tag = 'internal scratch']
  %s0 = inlined_call_operand.vmem [shape: f32[400,32], index: 0, kind: input, shape index: {}]
  %s1 = inlined_call_operand.vmem [shape: f32[32,128], index: 1, kind: input, shape index: {}]
  %s2 = inlined_call_operand.vmem [shape: f32[1,128], index: 2, kind: input, shape index: {}]
  %s3 = inlined_call_operand.vmem [shape: f32[128,32], index: 3, kind: input, shape index: {}]
  %s4 = inlined_call_operand.vmem [shape: f32[1,32], index: 4, kind: input, shape index: {}]
  %s5 = inlined_call_operand.vmem [shape: f32[400,32], index: 5, kind: output, shape index: {}]
  %s6 = sld [smem:[#allocation0]]
  $region30: #{tpu_custom_call.1} parent=0
    _
  %s8 = ssub.s32 1, %s6
  %s9 = scalar_select 0, %s8, %s6
  // Predicated region
  $region2: #{tpu_custom_call.1} parent=0 // pred_check
    _
  $region3: #{tpu_custom_call.1} parent=0 // pred_check_branch
    %11 = sbr.rel (0) target = $region5
  $region4: #{tpu_custom_call.1} parent=0 // pred_region
    _
  $region5: #{tpu_custom_call.1} parent=0 // pred_fallthru
    _
  // Predicated region
  $region6: #{tpu_custom_call.1} parent=0 // pred_check
    _
  $region7: #{tpu_custom_call.1} parent=0 // pred_check_branch
    %13 = sbr.rel (0) target = $region9
  $region8: #{tpu_custom_call.1} parent=0 // pred_region
    _
  $region9: #{tpu_custom_call.1} parent=0 // pred_fallthru
    _
  // Predicated region
  $region10: #{tpu_custom_call.1} parent=0 // pred_check
    _
  $region11: #{tpu_custom_call.1} parent=0 // pred_check_branch
    %15 = sbr.rel (0) target = $region13
  $region12: #{tpu_custom_call.1} parent=0 // pred_region
    _
  $region13: #{tpu_custom_call.1} parent=0 // pred_fallthru
    _
  // Predicated region
  $region14: #{tpu_custom_call.1} parent=0 // pred_check
    _
  $region15: #{tpu_custom_call.1} parent=0 // pred_check_branch
    %17 = sbr.rel (0) target = $region17
  $region16: #{tpu_custom_call.1} parent=0 // pred_region
    _
  $region17: #{tpu_custom_call.1} parent=0 // pred_fallthru
    _
  // Predicated region
  $region18: #{tpu_custom_call.1} parent=0 // pred_check
    _
  $region19: #{tpu_custom_call.1} parent=0 // pred_check_branch
    %19 = sbr.rel (0) target = $region21
  $region20: #{tpu_custom_call.1} parent=0 // pred_region
    _
  $region21: #{tpu_custom_call.1} parent=0 // pred_fallthru
    _
  %v20 = vld [vmem:[%s0] sm:$0xff]
  %v21 = vld [vmem:[%s0 + $0x8] sm:$0xff]
  %v22 = vld [vmem:[%s0 + $0x10] sm:$0xff]
  %v23 = vld [vmem:[%s0 + $0x18] sm:$0xff]
  %v24 = vld [vmem:[%s0 + $0x20] sm:$0xff]
  %v25 = vld [vmem:[%s0 + $0x28] sm:$0xff]
  %v26 = vld [vmem:[%s0 + $0x30] sm:$0xff]
  %v27 = vld [vmem:[%s0 + $0x38] sm:$0xff]
  %v28 = vld [vmem:[%s0 + $0x40] sm:$0xff]
  %v29 = vld [vmem:[%s0 + $0x48] sm:$0xff]
  %v30 = vld [vmem:[%s0 + $0x50] sm:$0xff]
  %v31 = vld [vmem:[%s0 + $0x58] sm:$0xff]
  %v32 = vld [vmem:[%s0 + $0x60] sm:$0xff]
  %v33 = vld [vmem:[%s0 + $0x68] sm:$0xff]
  %v34 = vld [vmem:[%s0 + $0x70] sm:$0xff]
  %v35 = vld [vmem:[%s0 + $0x78] sm:$0xff]
  %v36 = vld [vmem:[%s0 + $0x80] sm:$0xff]
  %v37 = vld [vmem:[%s0 + $0x88] sm:$0xff]
  %v38 = vld [vmem:[%s0 + $0x90] sm:$0xff]
  %v39 = vld [vmem:[%s0 + $0x98] sm:$0xff]
  %v40 = vld [vmem:[%s0 + $0xa0] sm:$0xff]
  %v41 = vld [vmem:[%s0 + $0xa8] sm:$0xff]
  %v42 = vld [vmem:[%s0 + $0xb0] sm:$0xff]
  %v43 = vld [vmem:[%s0 + $0xb8] sm:$0xff]
  %v44 = vld [vmem:[%s0 + $0xc0] sm:$0xff]
  %v45 = vld [vmem:[%s0 + $0xc8] sm:$0xff]
  %v46 = vld [vmem:[%s0 + $0xd0] sm:$0xff]
  %v47 = vld [vmem:[%s0 + $0xd8] sm:$0xff]
  %v48 = vld [vmem:[%s0 + $0xe0] sm:$0xff]
  %v49 = vld [vmem:[%s0 + $0xe8] sm:$0xff]
  %v50 = vld [vmem:[%s0 + $0xf0] sm:$0xff]
  %v51 = vld [vmem:[%s0 + $0xf8] sm:$0xff]
  %v52 = vld [vmem:[%s0 + $0x100] sm:$0xff]
  %v53 = vld [vmem:[%s0 + $0x108] sm:$0xff]
  %v54 = vld [vmem:[%s0 + $0x110] sm:$0xff]
  %v55 = vld [vmem:[%s0 + $0x118] sm:$0xff]
  %v56 = vld [vmem:[%s0 + $0x120] sm:$0xff]
  %v57 = vld [vmem:[%s0 + $0x128] sm:$0xff]
  %v58 = vld [vmem:[%s0 + $0x130] sm:$0xff]
  %v59 = vld [vmem:[%s0 + $0x138] sm:$0xff]
  %v60 = vld [vmem:[%s0 + $0x140] sm:$0xff]
  %v61 = vld [vmem:[%s0 + $0x148] sm:$0xff]
  %v62 = vld [vmem:[%s0 + $0x150] sm:$0xff]
  %v63 = vld [vmem:[%s0 + $0x158] sm:$0xff]
  %v64 = vld [vmem:[%s0 + $0x160] sm:$0xff]
  %v65 = vld [vmem:[%s0 + $0x168] sm:$0xff]
  %v66 = vld [vmem:[%s0 + $0x170] sm:$0xff]
  %v67 = vld [vmem:[%s0 + $0x178] sm:$0xff]
  %v68 = vld [vmem:[%s0 + $0x180] sm:$0xff]
  %v69 = vld [vmem:[%s0 + $0x188] sm:$0xff]
  %v70 = vld [vmem:[%s1] sm:$0xff]
  %v71 = vld [vmem:[%s1 + $0x8] sm:$0xff]
  %v72 = vld [vmem:[%s1 + $0x10] sm:$0xff]
  %v73 = vld [vmem:[%s1 + $0x18] sm:$0xff]
  %v74 = vld [vmem:[%s2] sm:$0x1]
  %v76 = vlaneseq
  %v77 = vshrl.u32 %v76, 7
  %v78 = vsub.s32 0, %v77
  %v79 = vrot.slane %v74, %v78
  %vm81 = vcmask 261120
  %v83 = vsel %vm81, %v20, 0
  %v86 = vsel %vm81, %v21, 0
  %v89 = vsel %vm81, %v22, 0
  %v92 = vsel %vm81, %v23, 0
  %v95 = vsel %vm81, %v24, 0
  %v98 = vsel %vm81, %v25, 0
  %v101 = vsel %vm81, %v26, 0
  %v104 = vsel %vm81, %v27, 0
  %v107 = vsel %vm81, %v28, 0
  %v110 = vsel %vm81, %v29, 0
  %v113 = vsel %vm81, %v30, 0
  %v116 = vsel %vm81, %v31, 0
  %v119 = vsel %vm81, %v32, 0
  %v122 = vsel %vm81, %v33, 0
  %v125 = vsel %vm81, %v34, 0
  %v128 = vsel %vm81, %v35, 0
  %v131 = vsel %vm81, %v36, 0
  %v134 = vsel %vm81, %v37, 0
  %v137 = vsel %vm81, %v38, 0
  %v140 = vsel %vm81, %v39, 0
  %v143 = vsel %vm81, %v40, 0
  %v146 = vsel %vm81, %v41, 0
  %v149 = vsel %vm81, %v42, 0
  %v152 = vsel %vm81, %v43, 0
  %v155 = vsel %vm81, %v44, 0
  %v158 = vsel %vm81, %v45, 0
  %v161 = vsel %vm81, %v46, 0
  %v164 = vsel %vm81, %v47, 0
  %v167 = vsel %vm81, %v48, 0
  %v170 = vsel %vm81, %v49, 0
  %v173 = vsel %vm81, %v50, 0
  %v176 = vsel %vm81, %v51, 0
  %v179 = vsel %vm81, %v52, 0
  %v182 = vsel %vm81, %v53, 0
  %v185 = vsel %vm81, %v54, 0
  %v188 = vsel %vm81, %v55, 0
  %v191 = vsel %vm81, %v56, 0
  %v194 = vsel %vm81, %v57, 0
  %v197 = vsel %vm81, %v58, 0
  %v200 = vsel %vm81, %v59, 0
  %v203 = vsel %vm81, %v60, 0
  %v206 = vsel %vm81, %v61, 0
  %v209 = vsel %vm81, %v62, 0
  %v212 = vsel %vm81, %v63, 0
  %v215 = vsel %vm81, %v64, 0
  %v218 = vsel %vm81, %v65, 0
  %v221 = vsel %vm81, %v66, 0
  %v224 = vsel %vm81, %v67, 0
  %v227 = vsel %vm81, %v68, 0
  %v230 = vsel %vm81, %v69, 0
  %232 = vmatprep.subr.mxu0 0.0
  %233 = vmatpush1.msra.mxu0 %v70
  %234 = vmatprep.subr.mxu0 0.0
  %235 = vmatpush1.msra.mxu0 %v71
  %236 = vmatprep.subr.mxu0 0.0
  %237 = vmatpush1.msra.mxu0 %v72
  %238 = vmatprep.subr.mxu0 0.0
  %239 = vmatpush1.msra.mxu0 %v73
  %240 = vmatprep.subr.mxu0 0.0
  %241 = vmatpush1.msra.mxu0 0.0
  %242 = vmatprep.subr.mxu0 0.0
  %243 = vmatpush1.msra.mxu0 0.0
  %244 = vmatprep.subr.mxu0 0.0
  %245 = vmatpush1.msra.mxu0 0.0
  %246 = vmatprep.subr.mxu0 0.0
  %247 = vmatpush1.msra.mxu0 0.0
  %248 = vmatprep.subr.mxu0 0.0
  %249 = vmatpush1.msra.mxu0 0.0
  %250 = vmatprep.subr.mxu0 0.0
  %251 = vmatpush1.msra.mxu0 0.0
  %252 = vmatprep.subr.mxu0 0.0
  %253 = vmatpush1.msra.mxu0 0.0
  %254 = vmatprep.subr.mxu0 0.0
  %255 = vmatpush1.msra.mxu0 0.0
  %256 = vmatprep.subr.mxu0 0.0
  %257 = vmatpush1.msra.mxu0 0.0
  %258 = vmatprep.subr.mxu0 0.0
  %259 = vmatpush1.msra.mxu0 0.0
  %260 = vmatprep.subr.mxu0 0.0
  %261 = vmatpush1.msra.mxu0 0.0
  %262 = vmatprep.subr.mxu0 0.0
  %263 = vmatpush1.msra.mxu0 0.0
  %264 = vmatprep.subr.mxu0 0.0
  %265 = vmatpush1.msra.mxu0 0.0
  %266 = vmatprep.subr.mxu0 0.0
  %267 = vmatpush1.msra.mxu0 0.0
  %268 = vmatprep.subr.mxu0 0.0
  %269 = vmatpush1.msra.mxu0 0.0
  %270 = vmatprep.subr.mxu0 0.0
  %271 = vmatpush1.msra.mxu0 0.0
  %272 = vmatprep.subr.mxu0 0.0
  %273 = vmatpush1.msra.mxu0 0.0
  %274 = vmatprep.subr.mxu0 0.0
  %275 = vmatpush1.msra.mxu0 0.0
  %276 = vmatprep.subr.mxu0 0.0
  %277 = vmatpush1.msra.mxu0 0.0
  %278 = vmatprep.subr.mxu0 0.0
  %279 = vmatpush1.msra.mxu0 0.0
  %280 = vmatprep.subr.mxu0 0.0
  %281 = vmatpush1.msra.mxu0 0.0
  %282 = vmatprep.subr.mxu0 0.0
  %283 = vmatpush1.msra.mxu0 0.0
  %284 = vmatprep.subr.mxu0 0.0
  %285 = vmatpush1.msra.mxu0 0.0
  %286 = vmatprep.subr.mxu0 0.0
  %287 = vmatpush1.msra.mxu0 0.0
  %288 = vmatprep.subr.mxu0 0.0
  %289 = vmatpush1.msra.mxu0 0.0
  %290 = vmatprep.subr.mxu0 0.0
  %291 = vmatpush1.msra.mxu0 0.0
  %292 = vmatprep.subr.mxu0 0.0
  %293 = vmatpush1.msra.mxu0 0.0
  %294 = vmatprep.subr.mxu0 0.0
  %295 = vmatpush1.msra.mxu0 0.0
  %296 = vmatprep.mubr.f32.mxu0 0.0
  %297 = vmatmul.mubr.f32.gmra.mrb[0].mxu0 %v83
  %v298 = vpop.f32.mrb[0].mxu0
  %v299 = vadd.f32 %v79, %v298
  %v300 = vpop.f32.mrb[0].mxu0
  %301 = vmatprep.mubr.f32.mxu0 0.0
  %302 = vmatmul.mubr.f32.gmra.mrb[0].mxu0 %v86
  %v303 = vpop.f32.mrb[0].mxu0
  %v304 = vadd.f32 %v79, %v303
  %v305 = vpop.f32.mrb[0].mxu0
  %306 = vmatprep.mubr.f32.mxu0 0.0
  %307 = vmatmul.mubr.f32.gmra.mrb[0].mxu0 %v89
  %v308 = vpop.f32.mrb[0].mxu0
  %v309 = vadd.f32 %v79, %v308
  %v310 = vpop.f32.mrb[0].mxu0
  %311 = vmatprep.mubr.f32.mxu0 0.0
  %312 = vmatmul.mubr.f32.gmra.mrb[0].mxu0 %v92
  %v313 = vpop.f32.mrb[0].mxu0
  %v314 = vadd.f32 %v79, %v313
  %v315 = vpop.f32.mrb[0].mxu0
  %316 = vmatprep.mubr.f32.mxu0 0.0
  %317 = vmatmul.mubr.f32.gmra.mrb[0].mxu0 %v95
  %v318 = vpop.f32.mrb[0].mxu0
  %v319 = vadd.f32 %v79, %v318
  %v320 = vpop.f32.mrb[0].mxu0
  %321 = vmatprep.mubr.f32.mxu0 0.0
  %322 = vmatmul.mubr.f32.gmra.mrb[0].mxu0 %v98
  %v323 = vpop.f32.mrb[0].mxu0
  %v324 = vadd.f32 %v79, %v323
  %v325 = vpop.f32.mrb[0].mxu0
  %326 = vmatprep.mubr.f32.mxu0 0.0
  %327 = vmatmul.mubr.f32.gmra.mrb[0].mxu0 %v101
  %v328 = vpop.f32.mrb[0].mxu0
  %v329 = vadd.f32 %v79, %v328
  %v330 = vpop.f32.mrb[0].mxu0
  %331 = vmatprep.mubr.f32.mxu0 0.0
  %332 = vmatmul.mubr.f32.gmra.mrb[0].mxu0 %v104
  %v333 = vpop.f32.mrb[0].mxu0
  %v334 = vadd.f32 %v79, %v333
  %v335 = vpop.f32.mrb[0].mxu0
  %336 = vmatprep.mubr.f32.mxu0 0.0
  %337 = vmatmul.mubr.f32.gmra.mrb[0].mxu0 %v107
  %v338 = vpop.f32.mrb[0].mxu0
  %v339 = vadd.f32 %v79, %v338
  %v340 = vpop.f32.mrb[0].mxu0
  %341 = vmatprep.mubr.f32.mxu0 0.0
  %342 = vmatmul.mubr.f32.gmra.mrb[0].mxu0 %v110
  %v343 = vpop.f32.mrb[0].mxu0
  %v344 = vadd.f32 %v79, %v343
  %v345 = vpop.f32.mrb[0].mxu0
  %346 = vmatprep.mubr.f32.mxu0 0.0
  %347 = vmatmul.mubr.f32.gmra.mrb[0].mxu0 %v113
  %v348 = vpop.f32.mrb[0].mxu0
  %v349 = vadd.f32 %v79, %v348
  %v350 = vpop.f32.mrb[0].mxu0
  %351 = vmatprep.mubr.f32.mxu0 0.0
  %352 = vmatmul.mubr.f32.gmra.mrb[0].mxu0 %v116
  %v353 = vpop.f32.mrb[0].mxu0
  %v354 = vadd.f32 %v79, %v353
  %v355 = vpop.f32.mrb[0].mxu0
  %356 = vmatprep.mubr.f32.mxu0 0.0
  %357 = vmatmul.mubr.f32.gmra.mrb[0].mxu0 %v119
  %v358 = vpop.f32.mrb[0].mxu0
  %v359 = vadd.f32 %v79, %v358
  %v360 = vpop.f32.mrb[0].mxu0
  %361 = vmatprep.mubr.f32.mxu0 0.0
  %362 = vmatmul.mubr.f32.gmra.mrb[0].mxu0 %v122
  %v363 = vpop.f32.mrb[0].mxu0
  %v364 = vadd.f32 %v79, %v363
  %v365 = vpop.f32.mrb[0].mxu0
  %366 = vmatprep.mubr.f32.mxu0 0.0
  %367 = vmatmul.mubr.f32.gmra.mrb[0].mxu0 %v125
  %v368 = vpop.f32.mrb[0].mxu0
  %v369 = vadd.f32 %v79, %v368
  %v370 = vpop.f32.mrb[0].mxu0
  %371 = vmatprep.mubr.f32.mxu0 0.0
  %372 = vmatmul.mubr.f32.gmra.mrb[0].mxu0 %v128
  %v373 = vpop.f32.mrb[0].mxu0
  %v374 = vadd.f32 %v79, %v373
  %v375 = vpop.f32.mrb[0].mxu0
  %376 = vmatprep.mubr.f32.mxu0 0.0
  %377 = vmatmul.mubr.f32.gmra.mrb[0].mxu0 %v131
  %v378 = vpop.f32.mrb[0].mxu0
  %v379 = vadd.f32 %v79, %v378
  %v380 = vpop.f32.mrb[0].mxu0
  %381 = vmatprep.mubr.f32.mxu0 0.0
  %382 = vmatmul.mubr.f32.gmra.mrb[0].mxu0 %v134
  %v383 = vpop.f32.mrb[0].mxu0
  %v384 = vadd.f32 %v79, %v383
  %v385 = vpop.f32.mrb[0].mxu0
  %386 = vmatprep.mubr.f32.mxu0 0.0
  %387 = vmatmul.mubr.f32.gmra.mrb[0].mxu0 %v137
  %v388 = vpop.f32.mrb[0].mxu0
  %v389 = vadd.f32 %v79, %v388
  %v390 = vpop.f32.mrb[0].mxu0
  %391 = vmatprep.mubr.f32.mxu0 0.0
  %392 = vmatmul.mubr.f32.gmra.mrb[0].mxu0 %v140
  %v393 = vpop.f32.mrb[0].mxu0
  %v394 = vadd.f32 %v79, %v393
  %v395 = vpop.f32.mrb[0].mxu0
  %396 = vmatprep.mubr.f32.mxu0 0.0
  %397 = vmatmul.mubr.f32.gmra.mrb[0].mxu0 %v143
  %v398 = vpop.f32.mrb[0].mxu0
  %v399 = vadd.f32 %v79, %v398
  %v400 = vpop.f32.mrb[0].mxu0
  %401 = vmatprep.mubr.f32.mxu0 0.0
  %402 = vmatmul.mubr.f32.gmra.mrb[0].mxu0 %v146
  %v403 = vpop.f32.mrb[0].mxu0
  %v404 = vadd.f32 %v79, %v403
  %v405 = vpop.f32.mrb[0].mxu0
  %406 = vmatprep.mubr.f32.mxu0 0.0
  %407 = vmatmul.mubr.f32.gmra.mrb[0].mxu0 %v149
  %v408 = vpop.f32.mrb[0].mxu0
  %v409 = vadd.f32 %v79, %v408
  %v410 = vpop.f32.mrb[0].mxu0
  %411 = vmatprep.mubr.f32.mxu0 0.0
  %412 = vmatmul.mubr.f32.gmra.mrb[0].mxu0 %v152
  %v413 = vpop.f32.mrb[0].mxu0
  %v414 = vadd.f32 %v79, %v413
  %v415 = vpop.f32.mrb[0].mxu0
  %416 = vmatprep.mubr.f32.mxu0 0.0
  %417 = vmatmul.mubr.f32.gmra.mrb[0].mxu0 %v155
  %v418 = vpop.f32.mrb[0].mxu0
  %v419 = vadd.f32 %v79, %v418
  %v420 = vpop.f32.mrb[0].mxu0
  %421 = vmatprep.mubr.f32.mxu0 0.0
  %422 = vmatmul.mubr.f32.gmra.mrb[0].mxu0 %v158
  %v423 = vpop.f32.mrb[0].mxu0
  %v424 = vadd.f32 %v79, %v423
  %v425 = vpop.f32.mrb[0].mxu0
  %426 = vmatprep.mubr.f32.mxu0 0.0
  %427 = vmatmul.mubr.f32.gmra.mrb[0].mxu0 %v161
  %v428 = vpop.f32.mrb[0].mxu0
  %v429 = vadd.f32 %v79, %v428
  %v430 = vpop.f32.mrb[0].mxu0
  %431 = vmatprep.mubr.f32.mxu0 0.0
  %432 = vmatmul.mubr.f32.gmra.mrb[0].mxu0 %v164
  %v433 = vpop.f32.mrb[0].mxu0
  %v434 = vadd.f32 %v79, %v433
  %v435 = vpop.f32.mrb[0].mxu0
  %436 = vmatprep.mubr.f32.mxu0 0.0
  %437 = vmatmul.mubr.f32.gmra.mrb[0].mxu0 %v167
  %v438 = vpop.f32.mrb[0].mxu0
  %v439 = vadd.f32 %v79, %v438
  %v440 = vpop.f32.mrb[0].mxu0
  %441 = vmatprep.mubr.f32.mxu0 0.0
  %442 = vmatmul.mubr.f32.gmra.mrb[0].mxu0 %v170
  %v443 = vpop.f32.mrb[0].mxu0
  %v444 = vadd.f32 %v79, %v443
  %v445 = vpop.f32.mrb[0].mxu0
  %446 = vmatprep.mubr.f32.mxu0 0.0
  %447 = vmatmul.mubr.f32.gmra.mrb[0].mxu0 %v173
  %v448 = vpop.f32.mrb[0].mxu0
  %v449 = vadd.f32 %v79, %v448
  %v450 = vpop.f32.mrb[0].mxu0
  %451 = vmatprep.mubr.f32.mxu0 0.0
  %452 = vmatmul.mubr.f32.gmra.mrb[0].mxu0 %v176
  %v453 = vpop.f32.mrb[0].mxu0
  %v454 = vadd.f32 %v79, %v453
  %v455 = vpop.f32.mrb[0].mxu0
  %456 = vmatprep.mubr.f32.mxu0 0.0
  %457 = vmatmul.mubr.f32.gmra.mrb[0].mxu0 %v179
  %v458 = vpop.f32.mrb[0].mxu0
  %v459 = vadd.f32 %v79, %v458
  %v460 = vpop.f32.mrb[0].mxu0
  %461 = vmatprep.mubr.f32.mxu0 0.0
  %462 = vmatmul.mubr.f32.gmra.mrb[0].mxu0 %v182
  %v463 = vpop.f32.mrb[0].mxu0
  %v464 = vadd.f32 %v79, %v463
  %v465 = vpop.f32.mrb[0].mxu0
  %466 = vmatprep.mubr.f32.mxu0 0.0
  %467 = vmatmul.mubr.f32.gmra.mrb[0].mxu0 %v185
  %v468 = vpop.f32.mrb[0].mxu0
  %v469 = vadd.f32 %v79, %v468
  %v470 = vpop.f32.mrb[0].mxu0
  %471 = vmatprep.mubr.f32.mxu0 0.0
  %472 = vmatmul.mubr.f32.gmra.mrb[0].mxu0 %v188
  %v473 = vpop.f32.mrb[0].mxu0
  %v474 = vadd.f32 %v79, %v473
  %v475 = vpop.f32.mrb[0].mxu0
  %476 = vmatprep.mubr.f32.mxu0 0.0
  %477 = vmatmul.mubr.f32.gmra.mrb[0].mxu0 %v191
  %v478 = vpop.f32.mrb[0].mxu0
  %v479 = vadd.f32 %v79, %v478
  %v480 = vpop.f32.mrb[0].mxu0
  %481 = vmatprep.mubr.f32.mxu0 0.0
  %482 = vmatmul.mubr.f32.gmra.mrb[0].mxu0 %v194
  %v483 = vpop.f32.mrb[0].mxu0
  %v484 = vadd.f32 %v79, %v483
  %v485 = vpop.f32.mrb[0].mxu0
  %486 = vmatprep.mubr.f32.mxu0 0.0
  %487 = vmatmul.mubr.f32.gmra.mrb[0].mxu0 %v197
  %v488 = vpop.f32.mrb[0].mxu0
  %v489 = vadd.f32 %v79, %v488
  %v490 = vpop.f32.mrb[0].mxu0
  %491 = vmatprep.mubr.f32.mxu0 0.0
  %492 = vmatmul.mubr.f32.gmra.mrb[0].mxu0 %v200
  %v493 = vpop.f32.mrb[0].mxu0
  %v494 = vadd.f32 %v79, %v493
  %v495 = vpop.f32.mrb[0].mxu0
  %496 = vmatprep.mubr.f32.mxu0 0.0
  %497 = vmatmul.mubr.f32.gmra.mrb[0].mxu0 %v203
  %v498 = vpop.f32.mrb[0].mxu0
  %v499 = vadd.f32 %v79, %v498
  %v500 = vpop.f32.mrb[0].mxu0
  %501 = vmatprep.mubr.f32.mxu0 0.0
  %502 = vmatmul.mubr.f32.gmra.mrb[0].mxu0 %v206
  %v503 = vpop.f32.mrb[0].mxu0
  %v504 = vadd.f32 %v79, %v503
  %v505 = vpop.f32.mrb[0].mxu0
  %506 = vmatprep.mubr.f32.mxu0 0.0
  %507 = vmatmul.mubr.f32.gmra.mrb[0].mxu0 %v209
  %v508 = vpop.f32.mrb[0].mxu0
  %v509 = vadd.f32 %v79, %v508
  %v510 = vpop.f32.mrb[0].mxu0
  %511 = vmatprep.mubr.f32.mxu0 0.0
  %512 = vmatmul.mubr.f32.gmra.mrb[0].mxu0 %v212
  %v513 = vpop.f32.mrb[0].mxu0
  %v514 = vadd.f32 %v79, %v513
  %v515 = vpop.f32.mrb[0].mxu0
  %516 = vmatprep.mubr.f32.mxu0 0.0
  %517 = vmatmul.mubr.f32.gmra.mrb[0].mxu0 %v215
  %v518 = vpop.f32.mrb[0].mxu0
  %v519 = vadd.f32 %v79, %v518
  %v520 = vpop.f32.mrb[0].mxu0
  %521 = vmatprep.mubr.f32.mxu0 0.0
  %522 = vmatmul.mubr.f32.gmra.mrb[0].mxu0 %v218
  %v523 = vpop.f32.mrb[0].mxu0
  %v524 = vadd.f32 %v79, %v523
  %v525 = vpop.f32.mrb[0].mxu0
  %526 = vmatprep.mubr.f32.mxu0 0.0
  %527 = vmatmul.mubr.f32.gmra.mrb[0].mxu0 %v221
  %v528 = vpop.f32.mrb[0].mxu0
  %v529 = vadd.f32 %v79, %v528
  %v530 = vpop.f32.mrb[0].mxu0
  %531 = vmatprep.mubr.f32.mxu0 0.0
  %532 = vmatmul.mubr.f32.gmra.mrb[0].mxu0 %v224
  %v533 = vpop.f32.mrb[0].mxu0
  %v534 = vadd.f32 %v79, %v533
  %v535 = vpop.f32.mrb[0].mxu0
  %536 = vmatprep.mubr.f32.mxu0 0.0
  %537 = vmatmul.mubr.f32.gmra.mrb[0].mxu0 %v227
  %v538 = vpop.f32.mrb[0].mxu0
  %v539 = vadd.f32 %v79, %v538
  %v540 = vpop.f32.mrb[0].mxu0
  %541 = vmatprep.mubr.f32.mxu0 0.0
  %542 = vmatmul.mubr.f32.gmra.mrb[0].mxu0 %v230
  %v543 = vpop.f32.mrb[0].mxu0
  %v544 = vadd.f32 %v79, %v543
  %v545 = vpop.f32.mrb[0].mxu0
  %546 = vdwg.mxu0
  %v547 = vmul.f32 %v299, 0.5
  %v548 = vmul.f32 %v304, 0.5
  %v549 = vmul.f32 %v309, 0.5
  %v550 = vmul.f32 %v314, 0.5
  %v551 = vmul.f32 %v319, 0.5
  %v552 = vmul.f32 %v324, 0.5
  %v553 = vmul.f32 %v329, 0.5
  %v554 = vmul.f32 %v334, 0.5
  %v555 = vmul.f32 %v339, 0.5
  %v556 = vmul.f32 %v344, 0.5
  %v557 = vmul.f32 %v349, 0.5
  %v558 = vmul.f32 %v354, 0.5
  %v559 = vmul.f32 %v359, 0.5
  %v560 = vmul.f32 %v364, 0.5
  %v561 = vmul.f32 %v369, 0.5
  %v562 = vmul.f32 %v374, 0.5
  %v563 = vmul.f32 %v379, 0.5
  %v564 = vmul.f32 %v384, 0.5
  %v565 = vmul.f32 %v389, 0.5
  %v566 = vmul.f32 %v394, 0.5
  %v567 = vmul.f32 %v399, 0.5
  %v568 = vmul.f32 %v404, 0.5
  %v569 = vmul.f32 %v409, 0.5
  %v570 = vmul.f32 %v414, 0.5
  %v571 = vmul.f32 %v419, 0.5
  %v572 = vmul.f32 %v424, 0.5
  %v573 = vmul.f32 %v429, 0.5
  %v574 = vmul.f32 %v434, 0.5
  %v575 = vmul.f32 %v439, 0.5
  %v576 = vmul.f32 %v444, 0.5
  %v577 = vmul.f32 %v449, 0.5
  %v578 = vmul.f32 %v454, 0.5
  %v579 = vmul.f32 %v459, 0.5
  %v580 = vmul.f32 %v464, 0.5
  %v581 = vmul.f32 %v469, 0.5
  %v582 = vmul.f32 %v474, 0.5
  %v583 = vmul.f32 %v479, 0.5
  %v584 = vmul.f32 %v484, 0.5
  %v585 = vmul.f32 %v489, 0.5
  %v586 = vmul.f32 %v494, 0.5
  %v587 = vmul.f32 %v499, 0.5
  %v588 = vmul.f32 %v504, 0.5
  %v589 = vmul.f32 %v509, 0.5
  %v590 = vmul.f32 %v514, 0.5
  %v591 = vmul.f32 %v519, 0.5
  %v592 = vmul.f32 %v524, 0.5
  %v593 = vmul.f32 %v529, 0.5
  %v594 = vmul.f32 %v534, 0.5
  %v595 = vmul.f32 %v539, 0.5
  %v596 = vmul.f32 %v544, 0.5
  %v597 = vmul.f32 %v299, 0.70710677
  %v598 = vmul.f32 %v304, 0.70710677
  %v599 = vmul.f32 %v309, 0.70710677
  %v600 = vmul.f32 %v314, 0.70710677
  %v601 = vmul.f32 %v319, 0.70710677
  %v602 = vmul.f32 %v324, 0.70710677
  %v603 = vmul.f32 %v329, 0.70710677
  %v604 = vmul.f32 %v334, 0.70710677
  %v605 = vmul.f32 %v339, 0.70710677
  %v606 = vmul.f32 %v344, 0.70710677
  %v607 = vmul.f32 %v349, 0.70710677
  %v608 = vmul.f32 %v354, 0.70710677
  %v609 = vmul.f32 %v359, 0.70710677
  %v610 = vmul.f32 %v364, 0.70710677
  %v611 = vmul.f32 %v369, 0.70710677
  %v612 = vmul.f32 %v374, 0.70710677
  %v613 = vmul.f32 %v379, 0.70710677
  %v614 = vmul.f32 %v384, 0.70710677
  %v615 = vmul.f32 %v389, 0.70710677
  %v616 = vmul.f32 %v394, 0.70710677
  %v617 = vmul.f32 %v399, 0.70710677
  %v618 = vmul.f32 %v404, 0.70710677
  %v619 = vmul.f32 %v409, 0.70710677
  %v620 = vmul.f32 %v414, 0.70710677
  %v621 = vmul.f32 %v419, 0.70710677
  %v622 = vmul.f32 %v424, 0.70710677
  %v623 = vmul.f32 %v429, 0.70710677
  %v624 = vmul.f32 %v434, 0.70710677
  %v625 = vmul.f32 %v439, 0.70710677
  %v626 = vmul.f32 %v444, 0.70710677
  %v627 = vmul.f32 %v449, 0.70710677
  %v628 = vmul.f32 %v454, 0.70710677
  %v629 = vmul.f32 %v459, 0.70710677
  %v630 = vmul.f32 %v464, 0.70710677
  %v631 = vmul.f32 %v469, 0.70710677
  %v632 = vmul.f32 %v474, 0.70710677
  %v633 = vmul.f32 %v479, 0.70710677
  %v634 = vmul.f32 %v484, 0.70710677
  %v635 = vmul.f32 %v489, 0.70710677
  %v636 = vmul.f32 %v494, 0.70710677
  %v637 = vmul.f32 %v499, 0.70710677
  %v638 = vmul.f32 %v504, 0.70710677
  %v639 = vmul.f32 %v509, 0.70710677
  %v640 = vmul.f32 %v514, 0.70710677
  %v641 = vmul.f32 %v519, 0.70710677
  %v642 = vmul.f32 %v524, 0.70710677
  %v643 = vmul.f32 %v529, 0.70710677
  %v644 = vmul.f32 %v534, 0.70710677
  %v645 = vmul.f32 %v539, 0.70710677
  %v646 = vmul.f32 %v544, 0.70710677
  %v647 = verf.f32.pop %v597
  %v648 = verf.f32.pop %v598
  %v649 = verf.f32.pop %v599
  %v650 = verf.f32.pop %v600
  %v651 = verf.f32.pop %v601
  %v652 = verf.f32.pop %v602
  %v653 = verf.f32.pop %v603
  %v654 = verf.f32.pop %v604
  %v655 = verf.f32.pop %v605
  %v656 = verf.f32.pop %v606
  %v657 = verf.f32.pop %v607
  %v658 = verf.f32.pop %v608
  %v659 = verf.f32.pop %v609
  %v660 = verf.f32.pop %v610
  %v661 = verf.f32.pop %v611
  %v662 = verf.f32.pop %v612
  %v663 = verf.f32.pop %v613
  %v664 = verf.f32.pop %v614
  %v665 = verf.f32.pop %v615
  %v666 = verf.f32.pop %v616
  %v667 = verf.f32.pop %v617
  %v668 = verf.f32.pop %v618
  %v669 = verf.f32.pop %v619
  %v670 = verf.f32.pop %v620
  %v671 = verf.f32.pop %v621
  %v672 = verf.f32.pop %v622
  %v673 = verf.f32.pop %v623
  %v674 = verf.f32.pop %v624
  %v675 = verf.f32.pop %v625
  %v676 = verf.f32.pop %v626
  %v677 = verf.f32.pop %v627
  %v678 = verf.f32.pop %v628
  %v679 = verf.f32.pop %v629
  %v680 = verf.f32.pop %v630
  %v681 = verf.f32.pop %v631
  %v682 = verf.f32.pop %v632
  %v683 = verf.f32.pop %v633
  %v684 = verf.f32.pop %v634
  %v685 = verf.f32.pop %v635
  %v686 = verf.f32.pop %v636
  %v687 = verf.f32.pop %v637
  %v688 = verf.f32.pop %v638
  %v689 = verf.f32.pop %v639
  %v690 = verf.f32.pop %v640
  %v691 = verf.f32.pop %v641
  %v692 = verf.f32.pop %v642
  %v693 = verf.f32.pop %v643
  %v694 = verf.f32.pop %v644
  %v695 = verf.f32.pop %v645
  %v696 = verf.f32.pop %v646
  %v697 = vadd.f32 %v647, 1.0
  %v698 = vadd.f32 %v648, 1.0
  %v699 = vadd.f32 %v649, 1.0
  %v700 = vadd.f32 %v650, 1.0
  %v701 = vadd.f32 %v651, 1.0
  %v702 = vadd.f32 %v652, 1.0
  %v703 = vadd.f32 %v653, 1.0
  %v704 = vadd.f32 %v654, 1.0
  %v705 = vadd.f32 %v655, 1.0
  %v706 = vadd.f32 %v656, 1.0
  %v707 = vadd.f32 %v657, 1.0
  %v708 = vadd.f32 %v658, 1.0
  %v709 = vadd.f32 %v659, 1.0
  %v710 = vadd.f32 %v660, 1.0
  %v711 = vadd.f32 %v661, 1.0
  %v712 = vadd.f32 %v662, 1.0
  %v713 = vadd.f32 %v663, 1.0
  %v714 = vadd.f32 %v664, 1.0
  %v715 = vadd.f32 %v665, 1.0
  %v716 = vadd.f32 %v666, 1.0
  %v717 = vadd.f32 %v667, 1.0
  %v718 = vadd.f32 %v668, 1.0
  %v719 = vadd.f32 %v669, 1.0
  %v720 = vadd.f32 %v670, 1.0
  %v721 = vadd.f32 %v671, 1.0
  %v722 = vadd.f32 %v672, 1.0
  %v723 = vadd.f32 %v673, 1.0
  %v724 = vadd.f32 %v674, 1.0
  %v725 = vadd.f32 %v675, 1.0
  %v726 = vadd.f32 %v676, 1.0
  %v727 = vadd.f32 %v677, 1.0
  %v728 = vadd.f32 %v678, 1.0
  %v729 = vadd.f32 %v679, 1.0
  %v730 = vadd.f32 %v680, 1.0
  %v731 = vadd.f32 %v681, 1.0
  %v732 = vadd.f32 %v682, 1.0
  %v733 = vadd.f32 %v683, 1.0
  %v734 = vadd.f32 %v684, 1.0
  %v735 = vadd.f32 %v685, 1.0
  %v736 = vadd.f32 %v686, 1.0
  %v737 = vadd.f32 %v687, 1.0
  %v738 = vadd.f32 %v688, 1.0
  %v739 = vadd.f32 %v689, 1.0
  %v740 = vadd.f32 %v690, 1.0
  %v741 = vadd.f32 %v691, 1.0
  %v742 = vadd.f32 %v692, 1.0
  %v743 = vadd.f32 %v693, 1.0
  %v744 = vadd.f32 %v694, 1.0
  %v745 = vadd.f32 %v695, 1.0
  %v746 = vadd.f32 %v696, 1.0
  %v747 = vmul.f32 %v547, %v697
  %v748 = vmul.f32 %v548, %v698
  %v749 = vmul.f32 %v549, %v699
  %v750 = vmul.f32 %v550, %v700
  %v751 = vmul.f32 %v551, %v701
  %v752 = vmul.f32 %v552, %v702
  %v753 = vmul.f32 %v553, %v703
  %v754 = vmul.f32 %v554, %v704
  %v755 = vmul.f32 %v555, %v705
  %v756 = vmul.f32 %v556, %v706
  %v757 = vmul.f32 %v557, %v707
  %v758 = vmul.f32 %v558, %v708
  %v759 = vmul.f32 %v559, %v709
  %v760 = vmul.f32 %v560, %v710
  %v761 = vmul.f32 %v561, %v711
  %v762 = vmul.f32 %v562, %v712
  %v763 = vmul.f32 %v563, %v713
  %v764 = vmul.f32 %v564, %v714
  %v765 = vmul.f32 %v565, %v715
  %v766 = vmul.f32 %v566, %v716
  %v767 = vmul.f32 %v567, %v717
  %v768 = vmul.f32 %v568, %v718
  %v769 = vmul.f32 %v569, %v719
  %v770 = vmul.f32 %v570, %v720
  %v771 = vmul.f32 %v571, %v721
  %v772 = vmul.f32 %v572, %v722
  %v773 = vmul.f32 %v573, %v723
  %v774 = vmul.f32 %v574, %v724
  %v775 = vmul.f32 %v575, %v725
  %v776 = vmul.f32 %v576, %v726
  %v777 = vmul.f32 %v577, %v727
  %v778 = vmul.f32 %v578, %v728
  %v779 = vmul.f32 %v579, %v729
  %v780 = vmul.f32 %v580, %v730
  %v781 = vmul.f32 %v581, %v731
  %v782 = vmul.f32 %v582, %v732
  %v783 = vmul.f32 %v583, %v733
  %v784 = vmul.f32 %v584, %v734
  %v785 = vmul.f32 %v585, %v735
  %v786 = vmul.f32 %v586, %v736
  %v787 = vmul.f32 %v587, %v737
  %v788 = vmul.f32 %v588, %v738
  %v789 = vmul.f32 %v589, %v739
  %v790 = vmul.f32 %v590, %v740
  %v791 = vmul.f32 %v591, %v741
  %v792 = vmul.f32 %v592, %v742
  %v793 = vmul.f32 %v593, %v743
  %v794 = vmul.f32 %v594, %v744
  %v795 = vmul.f32 %v595, %v745
  %v796 = vmul.f32 %v596, %v746
  %v797 = vld [vmem:[%s3] sm:$0xff]
  %v798 = vld [vmem:[%s3 + $0x8] sm:$0xff]
  %v799 = vld [vmem:[%s3 + $0x10] sm:$0xff]
  %v800 = vld [vmem:[%s3 + $0x18] sm:$0xff]
  %v801 = vld [vmem:[%s3 + $0x20] sm:$0xff]
  %v802 = vld [vmem:[%s3 + $0x28] sm:$0xff]
  %v803 = vld [vmem:[%s3 + $0x30] sm:$0xff]
  %v804 = vld [vmem:[%s3 + $0x38] sm:$0xff]
  %v805 = vld [vmem:[%s3 + $0x40] sm:$0xff]
  %v806 = vld [vmem:[%s3 + $0x48] sm:$0xff]
  %v807 = vld [vmem:[%s3 + $0x50] sm:$0xff]
  %v808 = vld [vmem:[%s3 + $0x58] sm:$0xff]
  %v809 = vld [vmem:[%s3 + $0x60] sm:$0xff]
  %v810 = vld [vmem:[%s3 + $0x68] sm:$0xff]
  %v811 = vld [vmem:[%s3 + $0x70] sm:$0xff]
  %v812 = vld [vmem:[%s3 + $0x78] sm:$0xff]
  %v813 = vld [vmem:[%s4] sm:$0x1]
  %v815 = vlaneseq
  %v816 = vshrl.u32 %v815, 7
  %v817 = vsub.s32 0, %v816
  %v818 = vrot.slane %v813, %v817
  %820 = vmatprep.subr.mxu0 0.0
  %821 = vmatpush1.msra.mxu0 %v797
  %822 = vmatprep.subr.mxu0 0.0
  %823 = vmatpush1.msra.mxu0 %v798
  %824 = vmatprep.subr.mxu0 0.0
  %825 = vmatpush1.msra.mxu0 %v799
  %826 = vmatprep.subr.mxu0 0.0
  %827 = vmatpush1.msra.mxu0 %v800
  %828 = vmatprep.subr.mxu0 0.0
  %829 = vmatpush1.msra.mxu0 %v801
  %830 = vmatprep.subr.mxu0 0.0
  %831 = vmatpush1.msra.mxu0 %v802
  %832 = vmatprep.subr.mxu0 0.0
  %833 = vmatpush1.msra.mxu0 %v803
  %834 = vmatprep.subr.mxu0 0.0
  %835 = vmatpush1.msra.mxu0 %v804
  %836 = vmatprep.subr.mxu0 0.0
  %837 = vmatpush1.msra.mxu0 %v805
  %838 = vmatprep.subr.mxu0 0.0
  %839 = vmatpush1.msra.mxu0 %v806
  %840 = vmatprep.subr.mxu0 0.0
  %841 = vmatpush1.msra.mxu0 %v807
  %842 = vmatprep.subr.mxu0 0.0
  %843 = vmatpush1.msra.mxu0 %v808
  %844 = vmatprep.subr.mxu0 0.0
  %845 = vmatpush1.msra.mxu0 %v809
  %846 = vmatprep.subr.mxu0 0.0
  %847 = vmatpush1.msra.mxu0 %v810
  %848 = vmatprep.subr.mxu0 0.0
  %849 = vmatpush1.msra.mxu0 %v811
  %850 = vmatprep.subr.mxu0 0.0
  %851 = vmatpush1.msra.mxu0 %v812
  %852 = vmatprep.subr.mxu0 0.0
  %853 = vmatpush1.msra.mxu0 0.0
  %854 = vmatprep.subr.mxu0 0.0
  %855 = vmatpush1.msra.mxu0 0.0
  %856 = vmatprep.subr.mxu0 0.0
  %857 = vmatpush1.msra.mxu0 0.0
  %858 = vmatprep.subr.mxu0 0.0
  %859 = vmatpush1.msra.mxu0 0.0
  %860 = vmatprep.subr.mxu0 0.0
  %861 = vmatpush1.msra.mxu0 0.0
  %862 = vmatprep.subr.mxu0 0.0
  %863 = vmatpush1.msra.mxu0 0.0
  %864 = vmatprep.subr.mxu0 0.0
  %865 = vmatpush1.msra.mxu0 0.0
  %866 = vmatprep.subr.mxu0 0.0
  %867 = vmatpush1.msra.mxu0 0.0
  %868 = vmatprep.subr.mxu0 0.0
  %869 = vmatpush1.msra.mxu0 0.0
  %870 = vmatprep.subr.mxu0 0.0
  %871 = vmatpush1.msra.mxu0 0.0
  %872 = vmatprep.subr.mxu0 0.0
  %873 = vmatpush1.msra.mxu0 0.0
  %874 = vmatprep.subr.mxu0 0.0
  %875 = vmatpush1.msra.mxu0 0.0
  %876 = vmatprep.subr.mxu0 0.0
  %877 = vmatpush1.msra.mxu0 0.0
  %878 = vmatprep.subr.mxu0 0.0
  %879 = vmatpush1.msra.mxu0 0.0
  %880 = vmatprep.subr.mxu0 0.0
  %881 = vmatpush1.msra.mxu0 0.0
  %882 = vmatprep.subr.mxu0 0.0
  %883 = vmatpush1.msra.mxu0 0.0
  %884 = vmatprep.mubr.f32.mxu0 0.0
  %885 = vmatmul.mubr.f32.gmra.mrb[0].mxu0 %v747
  %v886 = vpop.f32.mrb[0].mxu0
  %v887 = vadd.f32 %v818, %v886
  %v888 = vpop.f32.mrb[0].mxu0
  %889 = vmatprep.mubr.f32.mxu0 0.0
  %890 = vmatmul.mubr.f32.gmra.mrb[0].mxu0 %v748
  %v891 = vpop.f32.mrb[0].mxu0
  %v892 = vadd.f32 %v818, %v891
  %v893 = vpop.f32.mrb[0].mxu0
  %894 = vmatprep.mubr.f32.mxu0 0.0
  %895 = vmatmul.mubr.f32.gmra.mrb[0].mxu0 %v749
  %v896 = vpop.f32.mrb[0].mxu0
  %v897 = vadd.f32 %v818, %v896
  %v898 = vpop.f32.mrb[0].mxu0
  %899 = vmatprep.mubr.f32.mxu0 0.0
  %900 = vmatmul.mubr.f32.gmra.mrb[0].mxu0 %v750
  %v901 = vpop.f32.mrb[0].mxu0
  %v902 = vadd.f32 %v818, %v901
  %v903 = vpop.f32.mrb[0].mxu0
  %904 = vmatprep.mubr.f32.mxu0 0.0
  %905 = vmatmul.mubr.f32.gmra.mrb[0].mxu0 %v751
  %v906 = vpop.f32.mrb[0].mxu0
  %v907 = vadd.f32 %v818, %v906
  %v908 = vpop.f32.mrb[0].mxu0
  %909 = vmatprep.mubr.f32.mxu0 0.0
  %910 = vmatmul.mubr.f32.gmra.mrb[0].mxu0 %v752
  %v911 = vpop.f32.mrb[0].mxu0
  %v912 = vadd.f32 %v818, %v911
  %v913 = vpop.f32.mrb[0].mxu0
  %914 = vmatprep.mubr.f32.mxu0 0.0
  %915 = vmatmul.mubr.f32.gmra.mrb[0].mxu0 %v753
  %v916 = vpop.f32.mrb[0].mxu0
  %v917 = vadd.f32 %v818, %v916
  %v918 = vpop.f32.mrb[0].mxu0
  %919 = vmatprep.mubr.f32.mxu0 0.0
  %920 = vmatmul.mubr.f32.gmra.mrb[0].mxu0 %v754
  %v921 = vpop.f32.mrb[0].mxu0
  %v922 = vadd.f32 %v818, %v921
  %v923 = vpop.f32.mrb[0].mxu0
  %924 = vmatprep.mubr.f32.mxu0 0.0
  %925 = vmatmul.mubr.f32.gmra.mrb[0].mxu0 %v755
  %v926 = vpop.f32.mrb[0].mxu0
  %v927 = vadd.f32 %v818, %v926
  %v928 = vpop.f32.mrb[0].mxu0
  %929 = vmatprep.mubr.f32.mxu0 0.0
  %930 = vmatmul.mubr.f32.gmra.mrb[0].mxu0 %v756
  %v931 = vpop.f32.mrb[0].mxu0
  %v932 = vadd.f32 %v818, %v931
  %v933 = vpop.f32.mrb[0].mxu0
  %934 = vmatprep.mubr.f32.mxu0 0.0
  %935 = vmatmul.mubr.f32.gmra.mrb[0].mxu0 %v757
  %v936 = vpop.f32.mrb[0].mxu0
  %v937 = vadd.f32 %v818, %v936
  %v938 = vpop.f32.mrb[0].mxu0
  %939 = vmatprep.mubr.f32.mxu0 0.0
  %940 = vmatmul.mubr.f32.gmra.mrb[0].mxu0 %v758
  %v941 = vpop.f32.mrb[0].mxu0
  %v942 = vadd.f32 %v818, %v941
  %v943 = vpop.f32.mrb[0].mxu0
  %944 = vmatprep.mubr.f32.mxu0 0.0
  %945 = vmatmul.mubr.f32.gmra.mrb[0].mxu0 %v759
  %v946 = vpop.f32.mrb[0].mxu0
  %v947 = vadd.f32 %v818, %v946
  %v948 = vpop.f32.mrb[0].mxu0
  %949 = vmatprep.mubr.f32.mxu0 0.0
  %950 = vmatmul.mubr.f32.gmra.mrb[0].mxu0 %v760
  %v951 = vpop.f32.mrb[0].mxu0
  %v952 = vadd.f32 %v818, %v951
  %v953 = vpop.f32.mrb[0].mxu0
  %954 = vmatprep.mubr.f32.mxu0 0.0
  %955 = vmatmul.mubr.f32.gmra.mrb[0].mxu0 %v761
  %v956 = vpop.f32.mrb[0].mxu0
  %v957 = vadd.f32 %v818, %v956
  %v958 = vpop.f32.mrb[0].mxu0
  %959 = vmatprep.mubr.f32.mxu0 0.0
  %960 = vmatmul.mubr.f32.gmra.mrb[0].mxu0 %v762
  %v961 = vpop.f32.mrb[0].mxu0
  %v962 = vadd.f32 %v818, %v961
  %v963 = vpop.f32.mrb[0].mxu0
  %964 = vmatprep.mubr.f32.mxu0 0.0
  %965 = vmatmul.mubr.f32.gmra.mrb[0].mxu0 %v763
  %v966 = vpop.f32.mrb[0].mxu0
  %v967 = vadd.f32 %v818, %v966
  %v968 = vpop.f32.mrb[0].mxu0
  %969 = vmatprep.mubr.f32.mxu0 0.0
  %970 = vmatmul.mubr.f32.gmra.mrb[0].mxu0 %v764
  %v971 = vpop.f32.mrb[0].mxu0
  %v972 = vadd.f32 %v818, %v971
  %v973 = vpop.f32.mrb[0].mxu0
  %974 = vmatprep.mubr.f32.mxu0 0.0
  %975 = vmatmul.mubr.f32.gmra.mrb[0].mxu0 %v765
  %v976 = vpop.f32.mrb[0].mxu0
  %v977 = vadd.f32 %v818, %v976
  %v978 = vpop.f32.mrb[0].mxu0
  %979 = vmatprep.mubr.f32.mxu0 0.0
  %980 = vmatmul.mubr.f32.gmra.mrb[0].mxu0 %v766
  %v981 = vpop.f32.mrb[0].mxu0
  %v982 = vadd.f32 %v818, %v981
  %v983 = vpop.f32.mrb[0].mxu0
  %984 = vmatprep.mubr.f32.mxu0 0.0
  %985 = vmatmul.mubr.f32.gmra.mrb[0].mxu0 %v767
  %v986 = vpop.f32.mrb[0].mxu0
  %v987 = vadd.f32 %v818, %v986
  %v988 = vpop.f32.mrb[0].mxu0
  %989 = vmatprep.mubr.f32.mxu0 0.0
  %990 = vmatmul.mubr.f32.gmra.mrb[0].mxu0 %v768
  %v991 = vpop.f32.mrb[0].mxu0
  %v992 = vadd.f32 %v818, %v991
  %v993 = vpop.f32.mrb[0].mxu0
  %994 = vmatprep.mubr.f32.mxu0 0.0
  %995 = vmatmul.mubr.f32.gmra.mrb[0].mxu0 %v769
  %v996 = vpop.f32.mrb[0].mxu0
  %v997 = vadd.f32 %v818, %v996
  %v998 = vpop.f32.mrb[0].mxu0
  %999 = vmatprep.mubr.f32.mxu0 0.0
  %1000 = vmatmul.mubr.f32.gmra.mrb[0].mxu0 %v770
  %v1001 = vpop.f32.mrb[0].mxu0
  %v1002 = vadd.f32 %v818, %v1001
  %v1003 = vpop.f32.mrb[0].mxu0
  %1004 = vmatprep.mubr.f32.mxu0 0.0
  %1005 = vmatmul.mubr.f32.gmra.mrb[0].mxu0 %v771
  %v1006 = vpop.f32.mrb[0].mxu0
  %v1007 = vadd.f32 %v818, %v1006
  %v1008 = vpop.f32.mrb[0].mxu0
  %1009 = vmatprep.mubr.f32.mxu0 0.0
  %1010 = vmatmul.mubr.f32.gmra.mrb[0].mxu0 %v772
  %v1011 = vpop.f32.mrb[0].mxu0
  %v1012 = vadd.f32 %v818, %v1011
  %v1013 = vpop.f32.mrb[0].mxu0
  %1014 = vmatprep.mubr.f32.mxu0 0.0
  %1015 = vmatmul.mubr.f32.gmra.mrb[0].mxu0 %v773
  %v1016 = vpop.f32.mrb[0].mxu0
  %v1017 = vadd.f32 %v818, %v1016
  %v1018 = vpop.f32.mrb[0].mxu0
  %1019 = vmatprep.mubr.f32.mxu0 0.0
  %1020 = vmatmul.mubr.f32.gmra.mrb[0].mxu0 %v774
  %v1021 = vpop.f32.mrb[0].mxu0
  %v1022 = vadd.f32 %v818, %v1021
  %v1023 = vpop.f32.mrb[0].mxu0
  %1024 = vmatprep.mubr.f32.mxu0 0.0
  %1025 = vmatmul.mubr.f32.gmra.mrb[0].mxu0 %v775
  %v1026 = vpop.f32.mrb[0].mxu0
  %v1027 = vadd.f32 %v818, %v1026
  %v1028 = vpop.f32.mrb[0].mxu0
  %1029 = vmatprep.mubr.f32.mxu0 0.0
  %1030 = vmatmul.mubr.f32.gmra.mrb[0].mxu0 %v776
  %v1031 = vpop.f32.mrb[0].mxu0
  %v1032 = vadd.f32 %v818, %v1031
  %v1033 = vpop.f32.mrb[0].mxu0
  %1034 = vmatprep.mubr.f32.mxu0 0.0
  %1035 = vmatmul.mubr.f32.gmra.mrb[0].mxu0 %v777
  %v1036 = vpop.f32.mrb[0].mxu0
  %v1037 = vadd.f32 %v818, %v1036
  %v1038 = vpop.f32.mrb[0].mxu0
  %1039 = vmatprep.mubr.f32.mxu0 0.0
  %1040 = vmatmul.mubr.f32.gmra.mrb[0].mxu0 %v778
  %v1041 = vpop.f32.mrb[0].mxu0
  %v1042 = vadd.f32 %v818, %v1041
  %v1043 = vpop.f32.mrb[0].mxu0
  %1044 = vmatprep.mubr.f32.mxu0 0.0
  %1045 = vmatmul.mubr.f32.gmra.mrb[0].mxu0 %v779
  %v1046 = vpop.f32.mrb[0].mxu0
  %v1047 = vadd.f32 %v818, %v1046
  %v1048 = vpop.f32.mrb[0].mxu0
  %1049 = vmatprep.mubr.f32.mxu0 0.0
  %1050 = vmatmul.mubr.f32.gmra.mrb[0].mxu0 %v780
  %v1051 = vpop.f32.mrb[0].mxu0
  %v1052 = vadd.f32 %v818, %v1051
  %v1053 = vpop.f32.mrb[0].mxu0
  %1054 = vmatprep.mubr.f32.mxu0 0.0
  %1055 = vmatmul.mubr.f32.gmra.mrb[0].mxu0 %v781
  %v1056 = vpop.f32.mrb[0].mxu0
  %v1057 = vadd.f32 %v818, %v1056
  %v1058 = vpop.f32.mrb[0].mxu0
  %1059 = vmatprep.mubr.f32.mxu0 0.0
  %1060 = vmatmul.mubr.f32.gmra.mrb[0].mxu0 %v782
  %v1061 = vpop.f32.mrb[0].mxu0
  %v1062 = vadd.f32 %v818, %v1061
  %v1063 = vpop.f32.mrb[0].mxu0
  %1064 = vmatprep.mubr.f32.mxu0 0.0
  %1065 = vmatmul.mubr.f32.gmra.mrb[0].mxu0 %v783
  %v1066 = vpop.f32.mrb[0].mxu0
  %v1067 = vadd.f32 %v818, %v1066
  %v1068 = vpop.f32.mrb[0].mxu0
  %1069 = vmatprep.mubr.f32.mxu0 0.0
  %1070 = vmatmul.mubr.f32.gmra.mrb[0].mxu0 %v784
  %v1071 = vpop.f32.mrb[0].mxu0
  %v1072 = vadd.f32 %v818, %v1071
  %v1073 = vpop.f32.mrb[0].mxu0
  %1074 = vmatprep.mubr.f32.mxu0 0.0
  %1075 = vmatmul.mubr.f32.gmra.mrb[0].mxu0 %v785
  %v1076 = vpop.f32.mrb[0].mxu0
  %v1077 = vadd.f32 %v818, %v1076
  %v1078 = vpop.f32.mrb[0].mxu0
  %1079 = vmatprep.mubr.f32.mxu0 0.0
  %1080 = vmatmul.mubr.f32.gmra.mrb[0].mxu0 %v786
  %v1081 = vpop.f32.mrb[0].mxu0
  %v1082 = vadd.f32 %v818, %v1081
  %v1083 = vpop.f32.mrb[0].mxu0
  %1084 = vmatprep.mubr.f32.mxu0 0.0
  %1085 = vmatmul.mubr.f32.gmra.mrb[0].mxu0 %v787
  %v1086 = vpop.f32.mrb[0].mxu0
  %v1087 = vadd.f32 %v818, %v1086
  %v1088 = vpop.f32.mrb[0].mxu0
  %1089 = vmatprep.mubr.f32.mxu0 0.0
  %1090 = vmatmul.mubr.f32.gmra.mrb[0].mxu0 %v788
  %v1091 = vpop.f32.mrb[0].mxu0
  %v1092 = vadd.f32 %v818, %v1091
  %v1093 = vpop.f32.mrb[0].mxu0
  %1094 = vmatprep.mubr.f32.mxu0 0.0
  %1095 = vmatmul.mubr.f32.gmra.mrb[0].mxu0 %v789
  %v1096 = vpop.f32.mrb[0].mxu0
  %v1097 = vadd.f32 %v818, %v1096
  %v1098 = vpop.f32.mrb[0].mxu0
  %1099 = vmatprep.mubr.f32.mxu0 0.0
  %1100 = vmatmul.mubr.f32.gmra.mrb[0].mxu0 %v790
  %v1101 = vpop.f32.mrb[0].mxu0
  %v1102 = vadd.f32 %v818, %v1101
  %v1103 = vpop.f32.mrb[0].mxu0
  %1104 = vmatprep.mubr.f32.mxu0 0.0
  %1105 = vmatmul.mubr.f32.gmra.mrb[0].mxu0 %v791
  %v1106 = vpop.f32.mrb[0].mxu0
  %v1107 = vadd.f32 %v818, %v1106
  %v1108 = vpop.f32.mrb[0].mxu0
  %1109 = vmatprep.mubr.f32.mxu0 0.0
  %1110 = vmatmul.mubr.f32.gmra.mrb[0].mxu0 %v792
  %v1111 = vpop.f32.mrb[0].mxu0
  %v1112 = vadd.f32 %v818, %v1111
  %v1113 = vpop.f32.mrb[0].mxu0
  %1114 = vmatprep.mubr.f32.mxu0 0.0
  %1115 = vmatmul.mubr.f32.gmra.mrb[0].mxu0 %v793
  %v1116 = vpop.f32.mrb[0].mxu0
  %v1117 = vadd.f32 %v818, %v1116
  %v1118 = vpop.f32.mrb[0].mxu0
  %1119 = vmatprep.mubr.f32.mxu0 0.0
  %1120 = vmatmul.mubr.f32.gmra.mrb[0].mxu0 %v794
  %v1121 = vpop.f32.mrb[0].mxu0
  %v1122 = vadd.f32 %v818, %v1121
  %v1123 = vpop.f32.mrb[0].mxu0
  %1124 = vmatprep.mubr.f32.mxu0 0.0
  %1125 = vmatmul.mubr.f32.gmra.mrb[0].mxu0 %v795
  %v1126 = vpop.f32.mrb[0].mxu0
  %v1127 = vadd.f32 %v818, %v1126
  %v1128 = vpop.f32.mrb[0].mxu0
  %1129 = vmatprep.mubr.f32.mxu0 0.0
  %1130 = vmatmul.mubr.f32.gmra.mrb[0].mxu0 %v796
  %v1131 = vpop.f32.mrb[0].mxu0
  %v1132 = vadd.f32 %v818, %v1131
  %v1133 = vpop.f32.mrb[0].mxu0
  %1134 = vdwg.mxu0
  %1135 = vst.msk [vmem:[%s5] sm:$0xff] %vm81, %v887
  %1136 = vst.msk [vmem:[%s5 + $0x8] sm:$0xff] %vm81, %v892
  %1137 = vst.msk [vmem:[%s5 + $0x10] sm:$0xff] %vm81, %v897
  %1138 = vst.msk [vmem:[%s5 + $0x18] sm:$0xff] %vm81, %v902
  %1139 = vst.msk [vmem:[%s5 + $0x20] sm:$0xff] %vm81, %v907
  %1140 = vst.msk [vmem:[%s5 + $0x28] sm:$0xff] %vm81, %v912
  %1141 = vst.msk [vmem:[%s5 + $0x30] sm:$0xff] %vm81, %v917
  %1142 = vst.msk [vmem:[%s5 + $0x38] sm:$0xff] %vm81, %v922
  %1143 = vst.msk [vmem:[%s5 + $0x40] sm:$0xff] %vm81, %v927
  %1144 = vst.msk [vmem:[%s5 + $0x48] sm:$0xff] %vm81, %v932
  %1145 = vst.msk [vmem:[%s5 + $0x50] sm:$0xff] %vm81, %v937
  %1146 = vst.msk [vmem:[%s5 + $0x58] sm:$0xff] %vm81, %v942
  %1147 = vst.msk [vmem:[%s5 + $0x60] sm:$0xff] %vm81, %v947
  %1148 = vst.msk [vmem:[%s5 + $0x68] sm:$0xff] %vm81, %v952
  %1149 = vst.msk [vmem:[%s5 + $0x70] sm:$0xff] %vm81, %v957
  %1150 = vst.msk [vmem:[%s5 + $0x78] sm:$0xff] %vm81, %v962
  %1151 = vst.msk [vmem:[%s5 + $0x80] sm:$0xff] %vm81, %v967
  %1152 = vst.msk [vmem:[%s5 + $0x88] sm:$0xff] %vm81, %v972
  %1153 = vst.msk [vmem:[%s5 + $0x90] sm:$0xff] %vm81, %v977
  %1154 = vst.msk [vmem:[%s5 + $0x98] sm:$0xff] %vm81, %v982
  %1155 = vst.msk [vmem:[%s5 + $0xa0] sm:$0xff] %vm81, %v987
  %1156 = vst.msk [vmem:[%s5 + $0xa8] sm:$0xff] %vm81, %v992
  %1157 = vst.msk [vmem:[%s5 + $0xb0] sm:$0xff] %vm81, %v997
  %1158 = vst.msk [vmem:[%s5 + $0xb8] sm:$0xff] %vm81, %v1002
  %1159 = vst.msk [vmem:[%s5 + $0xc0] sm:$0xff] %vm81, %v1007
  %1160 = vst.msk [vmem:[%s5 + $0xc8] sm:$0xff] %vm81, %v1012
  %1161 = vst.msk [vmem:[%s5 + $0xd0] sm:$0xff] %vm81, %v1017
  %1162 = vst.msk [vmem:[%s5 + $0xd8] sm:$0xff] %vm81, %v1022
  %1163 = vst.msk [vmem:[%s5 + $0xe0] sm:$0xff] %vm81, %v1027
  %1164 = vst.msk [vmem:[%s5 + $0xe8] sm:$0xff] %vm81, %v1032
  %1165 = vst.msk [vmem:[%s5 + $0xf0] sm:$0xff] %vm81, %v1037
  %1166 = vst.msk [vmem:[%s5 + $0xf8] sm:$0xff] %vm81, %v1042
  %1167 = vst.msk [vmem:[%s5 + $0x100] sm:$0xff] %vm81, %v1047
  %1168 = vst.msk [vmem:[%s5 + $0x108] sm:$0xff] %vm81, %v1052
  %1169 = vst.msk [vmem:[%s5 + $0x110] sm:$0xff] %vm81, %v1057
  %1170 = vst.msk [vmem:[%s5 + $0x118] sm:$0xff] %vm81, %v1062
  %1171 = vst.msk [vmem:[%s5 + $0x120] sm:$0xff] %vm81, %v1067
  %1172 = vst.msk [vmem:[%s5 + $0x128] sm:$0xff] %vm81, %v1072
  %1173 = vst.msk [vmem:[%s5 + $0x130] sm:$0xff] %vm81, %v1077
  %1174 = vst.msk [vmem:[%s5 + $0x138] sm:$0xff] %vm81, %v1082
  %1175 = vst.msk [vmem:[%s5 + $0x140] sm:$0xff] %vm81, %v1087
  %1176 = vst.msk [vmem:[%s5 + $0x148] sm:$0xff] %vm81, %v1092
  %1177 = vst.msk [vmem:[%s5 + $0x150] sm:$0xff] %vm81, %v1097
  %1178 = vst.msk [vmem:[%s5 + $0x158] sm:$0xff] %vm81, %v1102
  %1179 = vst.msk [vmem:[%s5 + $0x160] sm:$0xff] %vm81, %v1107
  %1180 = vst.msk [vmem:[%s5 + $0x168] sm:$0xff] %vm81, %v1112
  %1181 = vst.msk [vmem:[%s5 + $0x170] sm:$0xff] %vm81, %v1117
  %1182 = vst.msk [vmem:[%s5 + $0x178] sm:$0xff] %vm81, %v1122
  %1183 = vst.msk [vmem:[%s5 + $0x180] sm:$0xff] %vm81, %v1127
  %1184 = vst.msk [vmem:[%s5 + $0x188] sm:$0xff] %vm81, %v1132
  // Predicated region
  $region22: #{tpu_custom_call.1} parent=0 // pred_check
    _
  $region23: #{tpu_custom_call.1} parent=0 // pred_check_branch
    %1186 = sbr.rel (0) target = $region25
  $region24: #{tpu_custom_call.1} parent=0 // pred_region
    _
  $region25: #{tpu_custom_call.1} parent=0 // pred_fallthru
    _
  // Predicated region
  $region26: #{tpu_custom_call.1} parent=0 // pred_check
    _
  $region27: #{tpu_custom_call.1} parent=0 // pred_check_branch
    %1188 = sbr.rel (0) target = $region29
  $region28: #{tpu_custom_call.1} parent=0 // pred_region
    _
  $region29: #{tpu_custom_call.1} parent=0 // pred_fallthru
    _

</llo_original>
